<compile_context>
chip_gen: v6e
topology: v6e:2x2x1
jax: 0.10.0
libtpu: 0.0.40
codegen_flags: <defaults>
</compile_context>

<pallas_src>
import numpy as np
import jax
import jax.numpy as jnp
from jax.experimental import pallas as pl
from jax.experimental.pallas import tpu as pltpu

_BLOCK_BYTES = 2 * 1024 * 1024   # ~2 MiB activation per block (v5e-safe)
_MAX_LANE = 2048                 # cap on the lane-dense last dim (multiple of 128)


def _droppath_kernel(s_ref, x_ref, o_ref):
    # s_ref: (tr, 1) f32 per-row scale (0 or 1/keep_prob), broadcast over lanes.
    # x_ref / o_ref: (tr, L) activation rows.  Pure VPU multiply; HBM-bound.
    o_ref[...] = x_ref[...] * s_ref[...].astype(o_ref.dtype)


def drop_path(x, drop_prob: float, key, training: bool = True, *,
              block_bytes: int = _BLOCK_BYTES, max_lane: int = _MAX_LANE):
    """JAX/Pallas equivalent of DropPath.forward.

    `key` may be a jax.random PRNG key or a plain int seed.
    """
    if drop_prob == 0.0 or not training:
        return x

    if isinstance(key, (int, np.integer)):
        key = jax.random.PRNGKey(int(key))

    keep_prob = 1.0 - drop_prob
    B = x.shape[0]
    F = int(np.prod(x.shape[1:]))

    # Per-sample binarized mask, pre-scaled by 1/keep_prob
    # (matches torch: floor(keep_prob + rand(B,1,...,1)) applied to x/keep_prob).
    u = jax.random.uniform(key, (B,), dtype=jnp.float32)
    scale = jnp.floor(jnp.float32(keep_prob) + u) * jnp.float32(1.0 / keep_prob)

    # Lane width: largest multiple-of-128 divisor of F (lane-dense, unmasked
    # stores).  If F is not 128-divisible, use the full feature extent as the
    # ragged last dim (block dim == full array dim is always legal) -- no pad,
    # no slice, no extra HBM passes.
    if F % 128 == 0:
        L = min(F, (max_lane // 128) * 128)
        while F % L:
            L -= 128
    else:
        L = F  # TODO(synk): very large non-128-divisible F would want a split/padded path.
    R = F // L
    total_rows = B * R

    # Per-row scale so one block may span several samples (tiny array).
    scale_rows = jnp.repeat(scale, R).reshape(total_rows, 1)

    xf = x.reshape(total_rows, L)   # free, contiguous view

    # Rows per block sized by bytes; multiple of 8 sublanes or the full extent.
    itemsize = x.dtype.itemsize
    bytes_per_row = L * itemsize
    rows_fit = max(1, block_bytes // bytes_per_row)
    if rows_fit >= total_rows:
        tr = total_rows
    else:
        tr = max(8, (rows_fit // 8) * 8)
        tr = min(tr, total_rows)
    num_blocks = pl.cdiv(total_rows, tr)
    # Note: if total_rows % tr != 0 the last block is partial; Pallas masks the
    # out-of-bounds writes at the array edge (padded reads are discarded).

    cost = pl.CostEstimate(
        flops=B * F,                                   # one multiply per element
        transcendentals=0,
        bytes_accessed=2 * B * F * itemsize + total_rows * 4,
    )

    out = pl.pallas_call(
        _droppath_kernel,
        out_shape=jax.ShapeDtypeStruct((total_rows, L), x.dtype),
        grid=(num_blocks,),
        in_specs=[pl.BlockSpec((tr, 1), lambda i: (i, 0)),
                  pl.BlockSpec((tr, L), lambda i: (i, 0))],
        out_specs=pl.BlockSpec((tr, L), lambda i: (i, 0)),
        compiler_params=pltpu.CompilerParams(
            # Stateless grid steps -> fully parallel (v7x megacore sharding).
            dimension_semantics=("parallel",),
        ),
        cost_estimate=cost,
    )(scale_rows, xf)

    return out.reshape(x.shape)


def _check_dropped_or_scaled(x, out, keep_prob):
    """Every sample must be either all-zero or exactly x / keep_prob."""
    x_np, out_np = np.asarray(x), np.asarray(out)
    for b in range(x_np.shape[0]):
        dropped = np.allclose(out_np[b], 0.0)
        kept = np.allclose(out_np[b], x_np[b] / keep_prob, rtol=1e-5, atol=1e-5)
        assert dropped or kept, f"sample {b}: neither dropped nor scaled-kept"


if __name__ == "__main__":
    root = jax.random.PRNGKey(0)
    kx, k1, k2, k3 = jax.random.split(root, 4)

    # 1) Standard case: F = C*H*W = 1024 (128-aligned, single block).
    x = jax.random.normal(kx, (2, 4, 16, 16), dtype=jnp.float32)
    drop_prob = 0.25
    out = jax.block_until_ready(drop_path(x, drop_prob, k1, training=True))
    _check_dropped_or_scaled(x, out, 1.0 - drop_prob)

    # 2) Ragged feature count (F = 105, not 128-divisible): no padding path.
    x_r = jax.random.normal(kx, (2, 5, 7, 3), dtype=jnp.float32)
    out_r = jax.block_until_ready(drop_path(x_r, 0.5, k2, training=True))
    _check_dropped_or_scaled(x_r, out_r, 0.5)

    # 3) Multi-block grid with a partial tail block and blocks spanning samples
    #    (shrunk block_bytes / max_lane so small shapes exercise the path).
    x_m = jax.random.normal(kx, (5, 4, 16, 16), dtype=jnp.float32)
    out_m = jax.block_until_ready(
        drop_path(x_m, drop_prob, k3, training=True, block_bytes=8192, max_lane=128))
    _check_dropped_or_scaled(x_m, out_m, 1.0 - drop_prob)

    # 4) Eval mode / drop_prob == 0 are identity (no kernel invoked).
    assert np.array_equal(np.asarray(drop_path(x, 0.0, k1, True)), np.asarray(x))
    assert np.array_equal(np.asarray(drop_path(x, drop_prob, k1, False)), np.asarray(x))

    print("KERNEL_OK")
</pallas_src>

<mosaic_0001>
module attributes {stable_mosaic.version = 11 : i64} {
  func.func @_droppath_kernel(%arg0: i32, %arg1: memref<2x1xf32, #tpu.memory_space<vmem>>, %arg2: memref<2x1024xf32, #tpu.memory_space<vmem>>, %arg3: memref<2x1024xf32, #tpu.memory_space<vmem>>) attributes {dimension_semantics = [#tpu.dimension_semantics<parallel>], iteration_bounds = array<i64: 1>, scalar_prefetch = 0 : i64, scratch_operands = 0 : i64, tpu.core_type = #tpu.core_type<tc>, window_params = [{transform_indices = @transform_0, window_bounds = array<i64: 2, 1>}, {transform_indices = @transform_1, window_bounds = array<i64: 2, 1024>}, {transform_indices = @transform_2, window_bounds = array<i64: 2, 1024>}]} {
    %c0 = arith.constant 0 : index
    %c0_0 = arith.constant 0 : index
    %0 = vector.load %arg2[%c0, %c0_0] : memref<2x1024xf32, #tpu.memory_space<vmem>>, vector<2x1024xf32>
    %c0_1 = arith.constant 0 : index
    %c0_2 = arith.constant 0 : index
    %1 = vector.load %arg1[%c0_1, %c0_2] : memref<2x1xf32, #tpu.memory_space<vmem>>, vector<2x1xf32>
    %2 = vector.broadcast %1 : vector<2x1xf32> to vector<2x1024xf32>
    %3 = arith.mulf %0, %2 : vector<2x1024xf32>
    %c0_3 = arith.constant 0 : index
    %c0_4 = arith.constant 0 : index
    %4 = vector.load %arg3[%c0_3, %c0_4] : memref<2x1024xf32, #tpu.memory_space<vmem>>, vector<2x1024xf32>
    tpu.vector_store %arg3[%c0_3, %c0_4], %3 {strides = array<i32>} : memref<2x1024xf32, #tpu.memory_space<vmem>>, vector<2x1024xf32>,
    return
  }
  func.func @transform_0(%arg0: i32) -> (i32, i32) {
    %c0_i32 = arith.constant 0 : i32
    %c0_i32_0 = arith.constant 0 : i32
    return %arg0, %c0_i32 : i32, i32
  }
  func.func @transform_1(%arg0: i32) -> (i32, i32) {
    %c0_i32 = arith.constant 0 : i32
    %c0_i32_0 = arith.constant 0 : i32
    return %arg0, %c0_i32 : i32, i32
  }
  func.func @transform_2(%arg0: i32) -> (i32, i32) {
    %c0_i32 = arith.constant 0 : i32
    %c0_i32_0 = arith.constant 0 : i32
    return %arg0, %c0_i32 : i32, i32
  }
}

</mosaic_0001>

<llo_original>
// kernel: tpu_custom_call.1
$region0: #{tpu_custom_call.1}
  #allocation0 [shape = 'u32[]', space=smem, size = 0x4, offset = 0x4, fixed_abs, tag = 'smem constant byte address 0x4 - core index']
  #allocation1 [shape = 'u32[144,128]{1,0:T(1,128)}', space=vmem, size = 0x12000, scoped, tag = 'internal scratch']
  %s0 = inlined_call_operand.vmem [shape: f32[2,1], index: 0, kind: input, shape index: {}]
  %s1 = inlined_call_operand.hbm [shape: f32[2,1024], index: 1, kind: input, shape index: {}]
  %s2 = inlined_call_operand.hbm [shape: f32[2,1024], index: 2, kind: output, shape index: {}]
  %s3 = sld [smem:[#allocation0]]
  $region22: #{tpu_custom_call.1} parent=0
    _
  %s5 = ssub.s32 1, %s3
  %s6 = scalar_select 0, %s5, %s3
  $region1: #{tpu_custom_call.1} parent=0
    #allocation2 [shape = 'u8[8192]{0}', space=vmem, size = 0x2000, scoped, tag = 'input window, operand 1, single buffered']
    #allocation3 [shape = 's32[1]{0}', space=sflag, size = 0x4, scoped, tag = 'scoped memory for tpu_custom_call.1']
    #allocation4 [shape = 's32[1]{0}', space=sflag, size = 0x4, scoped, tag = 'scoped memory for tpu_custom_call.1']
    #allocation5 [shape = 'u8[8192]{0}', space=vmem, size = 0x2000, scoped, tag = 'output window, operand 0, single buffered']
    %7 = vsyncpa [#allocation3], 0
    %8 = vsyncpa [#allocation4], 0
    // Predicated region
    $region2: #{tpu_custom_call.1} parent=1 // pred_check
      _
    $region3: #{tpu_custom_call.1} parent=1 // pred_check_branch
      %10 = sbr.rel (0) target = $region5
    $region4: #{tpu_custom_call.1} parent=1 // pred_region
      _
    $region5: #{tpu_custom_call.1} parent=1 // pred_fallthru
      _
    // Predicated region
    $region6: #{tpu_custom_call.1} parent=1 // pred_check
      _
    $region7: #{tpu_custom_call.1} parent=1 // pred_check_branch
      %12 = sbr.rel (0) target = $region9
    $region8: #{tpu_custom_call.1} parent=1 // pred_region
      %s14 = ssub.s32 256, 256
      %15 = vsyncadd [#allocation3], %s14
      %s17 = sshll.u32 [#allocation2], 4
      %s18 = int_to_ptr.vmem [resolvable:$true] %s17
      %20 = dma.hbm_to_vmem [thread:$0]  %s1, 256, %s18, [#allocation3]
    $region9: #{tpu_custom_call.1} parent=1 // pred_fallthru
      _
    // Predicated region
    $region10: #{tpu_custom_call.1} parent=1 // pred_check
      _
    $region11: #{tpu_custom_call.1} parent=1 // pred_check_branch
      %22 = sbr.rel (0) target = $region13
    $region12: #{tpu_custom_call.1} parent=1 // pred_region
      %23 = dma.done [#allocation3], 256
    $region13: #{tpu_custom_call.1} parent=1 // pred_fallthru
      _
    %v24 = vld [vmem:[#allocation2] sm:$0xff]
    %v25 = vld [vmem:[#allocation2 + $0x8] sm:$0xff]
    %v26 = vld [vmem:[%s0] sm:$0x3]
    %28 = vset.pattern.permute.xlu0 0
    %29 = vperm.xlu0 %28, %v26
    %v30 = vpop.permute.xlu0 %29
    %v32 = vunpack.c.l.s4 269488144
    %v33 = vunpack.c.0.s8 %v32
    %v34 = vlaneseq
    %v35 = vshrl.u32 %v34, 7
    %v36 = vsub.s32 %v33, %v35
    %v37 = vrot.slane %v30, %v36
    %v39 = vmul.f32 %v24, %v37
    %v40 = vmul.f32 %v25, %v37
    %41 = vst [vmem:[#allocation5] sm:$0xff] %v39
    %42 = vst [vmem:[#allocation5 + $0x8] sm:$0xff] %v40
    // Predicated region
    $region14: #{tpu_custom_call.1} parent=1 // pred_check
      _
    $region15: #{tpu_custom_call.1} parent=1 // pred_check_branch
      %44 = sbr.rel (0) target = $region17
    $region16: #{tpu_custom_call.1} parent=1 // pred_region
      %s46 = ssub.s32 256, 256
      %47 = vsyncadd [#allocation4], %s46
      %s49 = sshll.u32 [#allocation5], 4
      %s50 = int_to_ptr.vmem [resolvable:$true] %s49
      %52 = dma.vmem_to_hbm [thread:$0]  %s50, 256, %s2, [#allocation4]
    $region17: #{tpu_custom_call.1} parent=1 // pred_fallthru
      _
    // Predicated region
    $region18: #{tpu_custom_call.1} parent=1 // pred_check
      _
    $region19: #{tpu_custom_call.1} parent=1 // pred_check_branch
      %54 = sbr.rel (0) target = $region21
    $region20: #{tpu_custom_call.1} parent=1 // pred_region
      %55 = dma.done [#allocation4], 256
    $region21: #{tpu_custom_call.1} parent=1 // pred_fallthru
      _
    %56 = vsyncpa [#allocation3], 1
    %57 = vsyncpa [#allocation4], 1

</llo_original>
